<compile_context>
chip_gen: v5e
topology: v5e:2x2
jax: 0.10.0
libtpu: 0.0.40
codegen_flags: <defaults>
</compile_context>

<pallas_src>
import math
import jax
import jax.numpy as jnp
from jax import lax
from jax.experimental import pallas as pl
from jax.experimental.pallas import tpu as pltpu

# ---- continuous VPSDE constants (score_sde defaults) ----
BETA_0 = 0.1
BETA_1 = 20.0
SDE_T = 1.0
TIME_EPS = 1e-5
TEMB_DIM = 16


def vpsde_marginal_coeffs(t):
    log_mean_coeff = -0.25 * t ** 2 * (BETA_1 - BETA_0) - 0.5 * t * BETA_0
    mean_coeff = jnp.exp(log_mean_coeff)
    std = jnp.sqrt(-jnp.expm1(2.0 * log_mean_coeff))   # stable form of sqrt(1 - exp(..))
    return mean_coeff, std


def timestep_embedding(labels, dim=TEMB_DIM):
    half = dim // 2
    freqs = jnp.exp(
        -math.log(10000.0) * jnp.arange(half, dtype=jnp.float32) / (half - 1))
    args = labels.astype(jnp.float32)[:, None] * freqs[None, :]
    return jnp.concatenate([jnp.sin(args), jnp.cos(args)], axis=-1)


def init_params(key, channels):
    k1, k2, k3, k4 = jax.random.split(key, 4)
    w_conv = jax.random.normal(k1, (3, 3, channels, channels), jnp.float32)
    w_conv = w_conv / math.sqrt(9 * channels)           # HWIO
    b_conv = 0.01 * jax.random.normal(k2, (channels,), jnp.float32)
    w_t = jax.random.normal(k3, (TEMB_DIM, channels), jnp.float32) / math.sqrt(TEMB_DIM)
    b_t = 0.01 * jax.random.normal(k4, (channels,), jnp.float32)
    return dict(w_conv=w_conv, b_conv=b_conv, w_t=w_t, b_t=b_t)


def _make_loss_kernel(B, H, WC):
    BH = B * H

    def kernel(x_ref, z_ref, mc_ref, std_ref, temb_ref,
               w0_ref, w1_ref, w2_ref, out_ref):
        # x_ref/z_ref:   (B*H, W*C) f32 VMEM, lane-dense slab (row = b*H + h)
        # mc_ref/std_ref:(B*H, 1)   f32 VMEM per-row marginal coeffs
        # temb_ref:      (B*H, W*C) f32 VMEM (temb + conv bias, tiled across w, repeated over h)
        # w{0,1,2}_ref:  (W*C, W*C) bf16 VMEM banded conv blocks for dh = -1, 0, +1
        # out_ref:       (1,) f32 SMEM (sum of squared residuals)
        z = z_ref[...]                                                # (BH, WC)
        pert = mc_ref[...] * x_ref[...] + std_ref[...] * z            # perturbed_data

        # h-neighbour rows via XLU sublane rotation + boundary mask (SAME h-padding).
        row = lax.broadcasted_iota(jnp.int32, (BH, WC), 0)
        h = row % H
        up = jnp.where(h == 0, 0.0, pltpu.roll(pert, shift=1, axis=0))        # pert[h-1]
        dn = jnp.where(h == H - 1, 0.0, pltpu.roll(pert, shift=BH - 1, axis=0))  # pert[h+1]

        # 3x3 SAME conv = three accumulated MXU matmuls against the banded blocks
        # (w-padding is already encoded in the truncated band). bf16 in, f32 acc.
        conv = jnp.dot(up.astype(jnp.bfloat16), w0_ref[...],
                       preferred_element_type=jnp.float32)
        conv = conv + jnp.dot(pert.astype(jnp.bfloat16), w1_ref[...],
                              preferred_element_type=jnp.float32)
        conv = conv + jnp.dot(dn.astype(jnp.bfloat16), w2_ref[...],
                              preferred_element_type=jnp.float32)

        # score = -model_out / std  =>  score*std + z == z - model_out (std cancels).
        resid = z - (conv + temb_ref[...])
        out_ref[0] = jnp.sum(resid * resid)

    return kernel


def _banded_conv_weights(w_conv, W):
    """Expand the HWIO (3,3,C,C) filter into a (3*W*C, W*C) matrix so that the
    3x3 SAME conv becomes three accumulated matmuls: conv = up @ W0 + pert @ W1
    + dn @ W2 with up/pert/dn the h-shifted (rows, W*C) slabs. Zero-padding
    along w is encoded by truncating the band at the image borders."""
    blocks = []
    for dh in range(3):
        m = 0.0
        for dw in range(3):
            # S[w_in, w_out] = 1 iff w_in == w_out + dw - 1  (k = 1 - dw diagonal)
            shift = jnp.eye(W, k=1 - dw, dtype=jnp.float32)
            m = m + jnp.kron(shift, w_conv[dh, dw].astype(jnp.float32))
        blocks.append(m)                              # (W*C, W*C)
    return jnp.concatenate(blocks, axis=0)            # (3*W*C, W*C)


def loss_pallas(x, params, t, z):
    """x, z: (B, H, W, C) NHWC; t: (B,). Returns scalar loss."""
    B, H, W, C = x.shape
    WC = W * C
    BH = B * H

    mean_coeff, std = vpsde_marginal_coeffs(t)

    # tiny time-conditioning MLP stays in JAX glue; conv bias folded in, tiled
    # across w and repeated over h so it subtracts directly on the (B*H, W*C) slab.
    temb = timestep_embedding(t * 999.0) @ params["w_t"] + params["b_t"] + params["b_conv"]
    temb_rows = jnp.repeat(jnp.tile(temb.astype(jnp.float32), (1, W)), H, axis=0)  # (BH, WC)

    x_rows = x.reshape(BH, WC).astype(jnp.float32)      # lane-dense slab, row = b*H + h
    z_rows = z.reshape(BH, WC).astype(jnp.float32)
    mc_rows = jnp.repeat(mean_coeff.astype(jnp.float32), H)[:, None]   # (BH, 1)
    std_rows = jnp.repeat(std.astype(jnp.float32), H)[:, None]         # (BH, 1)

    # TODO(synk): if params are reused across training steps, hoist this
    # O((W*C)^2) band expansion (and its bf16 cast) out of the per-call path.
    w_band = _banded_conv_weights(params["w_conv"], W)                  # (3*WC, WC)
    w0, w1, w2 = [blk.astype(jnp.bfloat16) for blk in jnp.split(w_band, 3, axis=0)]

    out = pl.pallas_call(
        _make_loss_kernel(B, H, WC),
        out_shape=jax.ShapeDtypeStruct((1,), jnp.float32),
        in_specs=[
            pl.BlockSpec(memory_space=pltpu.MemorySpace.VMEM),   # x (BH, WC)
            pl.BlockSpec(memory_space=pltpu.MemorySpace.VMEM),   # z (BH, WC)
            pl.BlockSpec(memory_space=pltpu.MemorySpace.VMEM),   # mean_coeff (BH, 1)
            pl.BlockSpec(memory_space=pltpu.MemorySpace.VMEM),   # std (BH, 1)
            pl.BlockSpec(memory_space=pltpu.MemorySpace.VMEM),   # temb (+bias) (BH, WC)
            pl.BlockSpec(memory_space=pltpu.MemorySpace.VMEM),   # band block dh=-1 (bf16)
            pl.BlockSpec(memory_space=pltpu.MemorySpace.VMEM),   # band block dh= 0 (bf16)
            pl.BlockSpec(memory_space=pltpu.MemorySpace.VMEM),   # band block dh=+1 (bf16)
        ],
        out_specs=pl.BlockSpec(memory_space=pltpu.MemorySpace.SMEM),
    )(x_rows, z_rows, mc_rows, std_rows, temb_rows, w0, w1, w2)

    # reduce_mean=True: per-batch mean over H*W*C, then mean over batch.
    return out[0] / (B * H * W * C)


def loss_reference(x, params, t, z):
    """Pure-JAX reference identical to SDEDiffusion.sde_loss_fn (NHWC)."""
    B, H, W, C = x.shape
    mean_coeff, std = vpsde_marginal_coeffs(t)
    pert = mean_coeff[:, None, None, None] * x + std[:, None, None, None] * z
    conv = lax.conv_general_dilated(
        pert, params["w_conv"], window_strides=(1, 1), padding="SAME",
        dimension_numbers=("NHWC", "HWIO", "NHWC"),
        precision=lax.Precision.HIGHEST)
    temb = timestep_embedding(t * 999.0) @ params["w_t"] + params["b_t"]
    model_out = conv + params["b_conv"][None, None, None, :] + temb[:, None, None, :]
    score = -model_out / std[:, None, None, None]
    losses = jnp.mean(
        jnp.square(score * std[:, None, None, None] + z).reshape(B, -1), axis=-1)
    return jnp.mean(losses)


if __name__ == "__main__":
    key = jax.random.PRNGKey(0)
    kx, kp, kt, kz = jax.random.split(key, 4)

    B, C, H, W = 2, 8, 16, 16                     # W*C == 128 -> exactly one lane tile
    # PyTorch-style NCHW input, transposed to the kernel's NHWC layout
    x_nchw = jax.random.normal(kx, (B, C, H, W), jnp.float32)
    x = jnp.transpose(x_nchw, (0, 2, 3, 1))

    params = init_params(kp, C)

    # TODO(synk): forward() draws t ~ U(eps, T) and z ~ N(0, I) with torch RNG;
    # they are generated host-side with jax.random and passed in instead.
    t = jax.random.uniform(kt, (B,), jnp.float32) * (SDE_T - TIME_EPS) + TIME_EPS
    z = jax.random.normal(kz, x.shape, jnp.float32)

    loss = jax.jit(loss_pallas)(x, params, t, z)
    loss = jax.block_until_ready(loss)

    ref = loss_reference(x, params, t, z)
    assert jnp.allclose(loss, ref, rtol=1e-3, atol=1e-3), (loss, ref)

    print("KERNEL_OK")
</pallas_src>

<mosaic_0001>
module attributes {stable_mosaic.version = 11 : i64} {
  func.func @kernel(%arg0: memref<32x128xf32, #tpu.memory_space<vmem>>, %arg1: memref<32x128xf32, #tpu.memory_space<vmem>>, %arg2: memref<32x1xf32, #tpu.memory_space<vmem>>, %arg3: memref<32x1xf32, #tpu.memory_space<vmem>>, %arg4: memref<32x128xf32, #tpu.memory_space<vmem>>, %arg5: memref<128x128xbf16, #tpu.memory_space<vmem>>, %arg6: memref<128x128xbf16, #tpu.memory_space<vmem>>, %arg7: memref<128x128xbf16, #tpu.memory_space<vmem>>, %arg8: memref<1xf32, #tpu.memory_space<smem>>) attributes {dimension_semantics = [], scalar_prefetch = 0 : i64, scratch_operands = 0 : i64, tpu.core_type = #tpu.core_type<tc>} {
    %c0 = arith.constant 0 : index
    %c0_0 = arith.constant 0 : index
    %0 = vector.load %arg1[%c0, %c0_0] : memref<32x128xf32, #tpu.memory_space<vmem>>, vector<32x128xf32>
    %c0_1 = arith.constant 0 : index
    %c0_2 = arith.constant 0 : index
    %1 = vector.load %arg2[%c0_1, %c0_2] : memref<32x1xf32, #tpu.memory_space<vmem>>, vector<32x1xf32>
    %c0_3 = arith.constant 0 : index
    %c0_4 = arith.constant 0 : index
    %2 = vector.load %arg0[%c0_3, %c0_4] : memref<32x128xf32, #tpu.memory_space<vmem>>, vector<32x128xf32>
    %3 = vector.broadcast %1 : vector<32x1xf32> to vector<32x128xf32>
    %4 = arith.mulf %3, %2 : vector<32x128xf32>
    %c0_5 = arith.constant 0 : index
    %c0_6 = arith.constant 0 : index
    %5 = vector.load %arg3[%c0_5, %c0_6] : memref<32x1xf32, #tpu.memory_space<vmem>>, vector<32x1xf32>
    %6 = vector.broadcast %5 : vector<32x1xf32> to vector<32x128xf32>
    %7 = arith.mulf %6, %0 : vector<32x128xf32>
    %8 = arith.addf %4, %7 : vector<32x128xf32>
    %9 = tpu.iota {dimensions = array<i32: 0>} : vector<32x128xi32>
    %c16_i32 = arith.constant 16 : i32
    %c0_i32 = arith.constant 0 : i32
    %10 = arith.cmpi eq, %c16_i32, %c0_i32 : i32
    %c1_i32 = arith.constant 1 : i32
    %11 = arith.select %10, %c1_i32, %c16_i32 : i32
    %12 = vector.broadcast %11 : i32 to vector<32x128xi32>
    %13 = arith.remsi %9, %12 : vector<32x128xi32>
    %c0_i32_7 = arith.constant 0 : i32
    %14 = vector.broadcast %c0_i32_7 : i32 to vector<32x128xi32>
    %15 = arith.cmpi ne, %13, %14 : vector<32x128xi32>
    %c0_i32_8 = arith.constant 0 : i32
    %16 = vector.broadcast %c0_i32_8 : i32 to vector<32x128xi32>
    %17 = arith.cmpi slt, %13, %16 : vector<32x128xi32>
    %c0_i32_9 = arith.constant 0 : i32
    %18 = arith.cmpi slt, %11, %c0_i32_9 : i32
    %19 = vector.broadcast %18 : i1 to vector<32x128xi1>
    %20 = vector.broadcast %19 : vector<32x128xi1> to vector<32x128xi1>
    %21 = arith.xori %17, %20 : vector<32x128xi1>
    %22 = arith.andi %21, %15 : vector<32x128xi1>
    %23 = vector.broadcast %11 : i32 to vector<32x128xi32>
    %24 = arith.addi %13, %23 : vector<32x128xi32>
    %25 = arith.select %22, %24, %13 : vector<32x128xi1>, vector<32x128xi32>
    %c0_i32_10 = arith.constant 0 : i32
    %26 = vector.broadcast %c0_i32_10 : i32 to vector<32x128xi32>
    %27 = arith.cmpi eq, %25, %26 : vector<32x128xi32>
    %c1_i32_11 = arith.constant 1 : i32
    %28 = tpu.dynamic_rotate %8 by %c1_i32_11 dim 0 : vector<32x128xf32>, i32 -> vector<32x128xf32>
    %cst = arith.constant 0.000000e+00 : f32
    %29 = vector.broadcast %cst : f32 to vector<32x128xf32>
    %30 = arith.select %27, %29, %28 : vector<32x128xi1>, vector<32x128xf32>
    %c15_i32 = arith.constant 15 : i32
    %31 = vector.broadcast %c15_i32 : i32 to vector<32x128xi32>
    %32 = arith.cmpi eq, %25, %31 : vector<32x128xi32>
    %c31_i32 = arith.constant 31 : i32
    %33 = tpu.dynamic_rotate %8 by %c31_i32 dim 0 : vector<32x128xf32>, i32 -> vector<32x128xf32>
    %cst_12 = arith.constant 0.000000e+00 : f32
    %34 = vector.broadcast %cst_12 : f32 to vector<32x128xf32>
    %35 = arith.select %32, %34, %33 : vector<32x128xi1>, vector<32x128xf32>
    %36 = arith.truncf %30 : vector<32x128xf32> to vector<32x128xbf16>
    %c0_13 = arith.constant 0 : index
    %c0_14 = arith.constant 0 : index
    %37 = vector.load %arg5[%c0_13, %c0_14] : memref<128x128xbf16, #tpu.memory_space<vmem>>, vector<128x128xbf16>
    %cst_15 = arith.constant dense<0.000000e+00> : vector<32x128xf32>
    %38 = tpu.matmul %36, %37, %cst_15 {dimension_numbers = #tpu.dot_dimension_numbers<[1], [0], [0], [1], [0, 0, 1, 1], [], []>} : vector<32x128xbf16>, vector<128x128xbf16>, vector<32x128xf32> -> vector<32x128xf32>
    %39 = arith.truncf %8 : vector<32x128xf32> to vector<32x128xbf16>
    %c0_16 = arith.constant 0 : index
    %c0_17 = arith.constant 0 : index
    %40 = vector.load %arg6[%c0_16, %c0_17] : memref<128x128xbf16, #tpu.memory_space<vmem>>, vector<128x128xbf16>
    %cst_18 = arith.constant dense<0.000000e+00> : vector<32x128xf32>
    %41 = tpu.matmul %39, %40, %cst_18 {dimension_numbers = #tpu.dot_dimension_numbers<[1], [0], [0], [1], [0, 0, 1, 1], [], []>} : vector<32x128xbf16>, vector<128x128xbf16>, vector<32x128xf32> -> vector<32x128xf32>
    %42 = arith.addf %38, %41 : vector<32x128xf32>
    %43 = arith.truncf %35 : vector<32x128xf32> to vector<32x128xbf16>
    %c0_19 = arith.constant 0 : index
    %c0_20 = arith.constant 0 : index
    %44 = vector.load %arg7[%c0_19, %c0_20] : memref<128x128xbf16, #tpu.memory_space<vmem>>, vector<128x128xbf16>
    %cst_21 = arith.constant dense<0.000000e+00> : vector<32x128xf32>
    %45 = tpu.matmul %43, %44, %cst_21 {dimension_numbers = #tpu.dot_dimension_numbers<[1], [0], [0], [1], [0, 0, 1, 1], [], []>} : vector<32x128xbf16>, vector<128x128xbf16>, vector<32x128xf32> -> vector<32x128xf32>
    %46 = arith.addf %42, %45 : vector<32x128xf32>
    %c0_22 = arith.constant 0 : index
    %c0_23 = arith.constant 0 : index
    %47 = vector.load %arg4[%c0_22, %c0_23] : memref<32x128xf32, #tpu.memory_space<vmem>>, vector<32x128xf32>
    %48 = arith.addf %46, %47 : vector<32x128xf32>
    %49 = arith.subf %0, %48 : vector<32x128xf32>
    %50 = arith.mulf %49, %49 : vector<32x128xf32>
    %51 = vector.shape_cast %50 : vector<32x128xf32> to vector<1x32x128xf32>
    %cst_24 = arith.constant dense<0.000000e+00> : vector<1xf32>
    %52 = vector.multi_reduction <add>, %51, %cst_24 [1, 2] : vector<1x32x128xf32> to vector<1xf32>
    %53 = vector.shape_cast %52 : vector<1xf32> to vector<1x1x1xf32>
    %54 = vector.extract %53[0, 0, 0] : f32 from vector<1x1x1xf32>
    %c0_25 = arith.constant 0 : index
    %55 = memref.load %arg8[%c0_25] : memref<1xf32, #tpu.memory_space<smem>>
    memref.store %54, %arg8[%c0_25] : memref<1xf32, #tpu.memory_space<smem>>
    return
  }
}

</mosaic_0001>

<llo_original>
// kernel: tile.9
$region0: #{tile.9}
  %s0 = inlined_call_operand.vmem [shape: f32[2,16,8], index: 0, kind: input, shape index: {}]
  %s1 = inlined_call_operand.vmem [shape: f32[2,128], index: 1, kind: output, shape index: {}]
  $region1: #{tile.9} parent=0
    #allocation0 [shape = 'u8[4096]{0}', space=vmem, size = 0x1000, scoped, tag = 'scoped mem for output reshape']
    %s2 = smov 3
    %v3 = vld [vmem:[%s0] ss:$16 sm:%s2]
    %vm4 = vcmask 64512
    %5 = vst.msk [vmem:[#allocation0] sm:$0x3] %vm4, %v3
    %s6 = scalar_lea.vmem %s0, 15
    %s7 = smov 3
    %v8 = vld [vmem:[%s6] ss:$16 sm:%s7]
    %9 = vrot.lane.b32.xlu0 %v8, 120
    %v10 = vpop.permute.xlu0 %9
    %vm11 = vcmask 1048512
    %12 = vst.msk [vmem:[#allocation0] sm:$0x3] %vm11, %v10
    %s13 = scalar_lea.vmem %s0, 14
    %s14 = smov 3
    %v15 = vld [vmem:[%s13] ss:$16 sm:%s14]
    %16 = vrot.lane.b32.xlu0 %v15, 112
    %v17 = vpop.permute.xlu0 %16
    %vm18 = vcmask 982912
    %19 = vst.msk [vmem:[#allocation0] sm:$0x3] %vm18, %v17
    %s20 = scalar_lea.vmem %s0, 13
    %s21 = smov 3
    %v22 = vld [vmem:[%s20] ss:$16 sm:%s21]
    %23 = vrot.lane.b32.xlu0 %v22, 104
    %v24 = vpop.permute.xlu0 %23
    %vm25 = vcmask 917312
    %26 = vst.msk [vmem:[#allocation0] sm:$0x3] %vm25, %v24
    %s27 = scalar_lea.vmem %s0, 12
    %s28 = smov 3
    %v29 = vld [vmem:[%s27] ss:$16 sm:%s28]
    %30 = vrot.lane.b32.xlu0 %v29, 96
    %v31 = vpop.permute.xlu0 %30
    %vm32 = vcmask 851712
    %33 = vst.msk [vmem:[#allocation0] sm:$0x3] %vm32, %v31
    %s34 = scalar_lea.vmem %s0, 11
    %s35 = smov 3
    %v36 = vld [vmem:[%s34] ss:$16 sm:%s35]
    %37 = vrot.lane.b32.xlu0 %v36, 88
    %v38 = vpop.permute.xlu0 %37
    %vm39 = vcmask 786112
    %40 = vst.msk [vmem:[#allocation0] sm:$0x3] %vm39, %v38
    %s41 = scalar_lea.vmem %s0, 10
    %s42 = smov 3
    %v43 = vld [vmem:[%s41] ss:$16 sm:%s42]
    %44 = vrot.lane.b32.xlu0 %v43, 80
    %v45 = vpop.permute.xlu0 %44
    %vm46 = vcmask 720512
    %47 = vst.msk [vmem:[#allocation0] sm:$0x3] %vm46, %v45
    %s48 = scalar_lea.vmem %s0, 9
    %s49 = smov 3
    %v50 = vld [vmem:[%s48] ss:$16 sm:%s49]
    %51 = vrot.lane.b32.xlu0 %v50, 72
    %v52 = vpop.permute.xlu0 %51
    %vm53 = vcmask 654912
    %54 = vst.msk [vmem:[#allocation0] sm:$0x3] %vm53, %v52
    %s55 = scalar_lea.vmem %s0, 8
    %s56 = smov 3
    %v57 = vld [vmem:[%s55] ss:$16 sm:%s56]
    %58 = vrot.lane.b32.xlu0 %v57, 64
    %v59 = vpop.permute.xlu0 %58
    %vm60 = vcmask 589312
    %61 = vst.msk [vmem:[#allocation0] sm:$0x3] %vm60, %v59
    %s62 = scalar_lea.vmem %s0, 7
    %s63 = smov 3
    %v64 = vld [vmem:[%s62] ss:$16 sm:%s63]
    %65 = vrot.lane.b32.xlu0 %v64, 56
    %v66 = vpop.permute.xlu0 %65
    %vm67 = vcmask 523712
    %68 = vst.msk [vmem:[#allocation0] sm:$0x3] %vm67, %v66
    %s69 = scalar_lea.vmem %s0, 6
    %s70 = smov 3
    %v71 = vld [vmem:[%s69] ss:$16 sm:%s70]
    %72 = vrot.lane.b32.xlu0 %v71, 48
    %v73 = vpop.permute.xlu0 %72
    %vm74 = vcmask 458112
    %75 = vst.msk [vmem:[#allocation0] sm:$0x3] %vm74, %v73
    %s76 = scalar_lea.vmem %s0, 5
    %s77 = smov 3
    %v78 = vld [vmem:[%s76] ss:$16 sm:%s77]
    %79 = vrot.lane.b32.xlu0 %v78, 40
    %v80 = vpop.permute.xlu0 %79
    %vm81 = vcmask 392512
    %82 = vst.msk [vmem:[#allocation0] sm:$0x3] %vm81, %v80
    %s83 = scalar_lea.vmem %s0, 4
    %s84 = smov 3
    %v85 = vld [vmem:[%s83] ss:$16 sm:%s84]
    %86 = vrot.lane.b32.xlu0 %v85, 32
    %v87 = vpop.permute.xlu0 %86
    %vm88 = vcmask 326912
    %89 = vst.msk [vmem:[#allocation0] sm:$0x3] %vm88, %v87
    %s90 = scalar_lea.vmem %s0, 3
    %s91 = smov 3
    %v92 = vld [vmem:[%s90] ss:$16 sm:%s91]
    %93 = vrot.lane.b32.xlu0 %v92, 24
    %v94 = vpop.permute.xlu0 %93
    %vm95 = vcmask 261312
    %96 = vst.msk [vmem:[#allocation0] sm:$0x3] %vm95, %v94
    %s97 = scalar_lea.vmem %s0, 2
    %s98 = smov 3
    %v99 = vld [vmem:[%s97] ss:$16 sm:%s98]
    %100 = vrot.lane.b32.xlu0 %v99, 16
    %v101 = vpop.permute.xlu0 %100
    %vm102 = vcmask 195712
    %103 = vst.msk [vmem:[#allocation0] sm:$0x3] %vm102, %v101
    %s104 = scalar_lea.vmem %s0, 1
    %s105 = smov 3
    %v106 = vld [vmem:[%s104] ss:$16 sm:%s105]
    %107 = vrot.lane.b32.xlu0 %v106, 8
    %v108 = vpop.permute.xlu0 %107
    %vm109 = vcmask 130112
    %110 = vst.msk [vmem:[#allocation0] sm:$0x3] %vm109, %v108
    %s112 = ssub.s32 4, 1
    %v113 = vld [vmem:[#allocation0] sm:%s112]
    %s115 = ssub.s32 4, 1
    %116 = vst [vmem:[%s1] sm:%s115] %v113

// kernel: loss_pallas.1
$region0: #{loss_pallas.1}
  #allocation0 [shape = 'u32[]', space=smem, size = 0x4, offset = 0x4, fixed_abs, tag = 'smem constant byte address 0x4 - core index']
  #allocation1 [shape = 'u32[72,128]{1,0:T(1,128)}', space=vmem, size = 0x9000, scoped, tag = 'internal scratch']
  %s0 = inlined_call_operand.vmem [shape: f32[32,128], index: 0, kind: input, shape index: {}]
  %s1 = inlined_call_operand.vmem [shape: f32[32,128], index: 1, kind: input, shape index: {}]
  %s2 = inlined_call_operand.vmem [shape: f32[32,1], index: 2, kind: input, shape index: {}]
  %s3 = inlined_call_operand.vmem [shape: f32[32,1], index: 3, kind: input, shape index: {}]
  %s4 = inlined_call_operand.vmem [shape: f32[32,128], index: 4, kind: input, shape index: {}]
  %s5 = inlined_call_operand.vmem [shape: bf16[128,128], index: 5, kind: input, shape index: {}]
  %s6 = inlined_call_operand.vmem [shape: bf16[128,128], index: 6, kind: input, shape index: {}]
  %s7 = inlined_call_operand.vmem [shape: bf16[128,128], index: 7, kind: input, shape index: {}]
  %s8 = inlined_call_operand.hbm [shape: f32[1], index: 8, kind: output, shape index: {}]
  %s9 = sld [smem:[#allocation0]]
  $region42: #{loss_pallas.1} parent=0
    _
  %s11 = ssub.s32 1, %s9
  %s12 = scalar_select 0, %s11, %s9
  $region1: #{loss_pallas.1} parent=0
    #allocation2 [shape = 'u8[512]{0}', space=smem, size = 0x200, scoped, tag = 'output window, operand 0, single buffered']
    #allocation3 [shape = 's32[1]{0}', space=sflag, size = 0x4, scoped, tag = 'scoped memory for loss_pallas.1']
    %13 = vsyncpa [#allocation3], 0
    // Predicated region
    $region2: #{loss_pallas.1} parent=1 // pred_check
      _
    $region3: #{loss_pallas.1} parent=1 // pred_check_branch
      %15 = sbr.rel (0) target = $region5
    $region4: #{loss_pallas.1} parent=1 // pred_region
      _
    $region5: #{loss_pallas.1} parent=1 // pred_fallthru
      _
    // Predicated region
    $region6: #{loss_pallas.1} parent=1 // pred_check
      _
    $region7: #{loss_pallas.1} parent=1 // pred_check_branch
      %17 = sbr.rel (0) target = $region9
    $region8: #{loss_pallas.1} parent=1 // pred_region
      _
    $region9: #{loss_pallas.1} parent=1 // pred_fallthru
      _
    // Predicated region
    $region10: #{loss_pallas.1} parent=1 // pred_check
      _
    $region11: #{loss_pallas.1} parent=1 // pred_check_branch
      %19 = sbr.rel (0) target = $region13
    $region12: #{loss_pallas.1} parent=1 // pred_region
      _
    $region13: #{loss_pallas.1} parent=1 // pred_fallthru
      _
    // Predicated region
    $region14: #{loss_pallas.1} parent=1 // pred_check
      _
    $region15: #{loss_pallas.1} parent=1 // pred_check_branch
      %21 = sbr.rel (0) target = $region17
    $region16: #{loss_pallas.1} parent=1 // pred_region
      _
    $region17: #{loss_pallas.1} parent=1 // pred_fallthru
      _
    // Predicated region
    $region18: #{loss_pallas.1} parent=1 // pred_check
      _
    $region19: #{loss_pallas.1} parent=1 // pred_check_branch
      %23 = sbr.rel (0) target = $region21
    $region20: #{loss_pallas.1} parent=1 // pred_region
      _
    $region21: #{loss_pallas.1} parent=1 // pred_fallthru
      _
    // Predicated region
    $region22: #{loss_pallas.1} parent=1 // pred_check
      _
    $region23: #{loss_pallas.1} parent=1 // pred_check_branch
      %25 = sbr.rel (0) target = $region25
    $region24: #{loss_pallas.1} parent=1 // pred_region
      _
    $region25: #{loss_pallas.1} parent=1 // pred_fallthru
      _
    // Predicated region
    $region26: #{loss_pallas.1} parent=1 // pred_check
      _
    $region27: #{loss_pallas.1} parent=1 // pred_check_branch
      %27 = sbr.rel (0) target = $region29
    $region28: #{loss_pallas.1} parent=1 // pred_region
      _
    $region29: #{loss_pallas.1} parent=1 // pred_fallthru
      _
    // Predicated region
    $region30: #{loss_pallas.1} parent=1 // pred_check
      _
    $region31: #{loss_pallas.1} parent=1 // pred_check_branch
      %29 = sbr.rel (0) target = $region33
    $region32: #{loss_pallas.1} parent=1 // pred_region
      _
    $region33: #{loss_pallas.1} parent=1 // pred_fallthru
      _
    %v30 = vld [vmem:[%s1] sm:$0xff]
    %v31 = vld [vmem:[%s1 + $0x8] sm:$0xff]
    %v32 = vld [vmem:[%s1 + $0x10] sm:$0xff]
    %v33 = vld [vmem:[%s1 + $0x18] sm:$0xff]
    %v34 = vld [vmem:[%s2] sm:$0xff]
    %v35 = vld [vmem:[%s2 + $0x8] sm:$0xff]
    %v36 = vld [vmem:[%s2 + $0x10] sm:$0xff]
    %v37 = vld [vmem:[%s2 + $0x18] sm:$0xff]
    %v38 = vld [vmem:[%s0] sm:$0xff]
    %v39 = vld [vmem:[%s0 + $0x8] sm:$0xff]
    %v40 = vld [vmem:[%s0 + $0x10] sm:$0xff]
    %v41 = vld [vmem:[%s0 + $0x18] sm:$0xff]
    %43 = vset.pattern.permute.xlu0 0
    %44 = vperm.xlu0 %43, %v34
    %v45 = vpop.permute.xlu0 %44
    %48 = vset.pattern.permute.xlu0 0
    %49 = vperm.xlu0 %48, %v35
    %v50 = vpop.permute.xlu0 %49
    %53 = vset.pattern.permute.xlu0 0
    %54 = vperm.xlu0 %53, %v36
    %v55 = vpop.permute.xlu0 %54
    %58 = vset.pattern.permute.xlu0 0
    %59 = vperm.xlu0 %58, %v37
    %v60 = vpop.permute.xlu0 %59
    %v62 = vmul.f32 %v45, %v38
    %v63 = vmul.f32 %v50, %v39
    %v64 = vmul.f32 %v55, %v40
    %v65 = vmul.f32 %v60, %v41
    %v66 = vld [vmem:[%s3] sm:$0xff]
    %v67 = vld [vmem:[%s3 + $0x8] sm:$0xff]
    %v68 = vld [vmem:[%s3 + $0x10] sm:$0xff]
    %v69 = vld [vmem:[%s3 + $0x18] sm:$0xff]
    %71 = vset.pattern.permute.xlu0 0
    %72 = vperm.xlu0 %71, %v66
    %v73 = vpop.permute.xlu0 %72
    %76 = vset.pattern.permute.xlu0 0
    %77 = vperm.xlu0 %76, %v67
    %v78 = vpop.permute.xlu0 %77
    %81 = vset.pattern.permute.xlu0 0
    %82 = vperm.xlu0 %81, %v68
    %v83 = vpop.permute.xlu0 %82
    %86 = vset.pattern.permute.xlu0 0
    %87 = vperm.xlu0 %86, %v69
    %v88 = vpop.permute.xlu0 %87
    %v90 = vmul.f32 %v73, %v30
    %v91 = vmul.f32 %v78, %v31
    %v92 = vmul.f32 %v83, %v32
    %v93 = vmul.f32 %v88, %v33
    %v94 = vadd.f32 %v62, %v90
    %v95 = vadd.f32 %v63, %v91
    %v96 = vadd.f32 %v64, %v92
    %v97 = vadd.f32 %v65, %v93
    %v98 = vlaneseq
    %v99 = vshrl.u32 %v98, 7
    %v100 = vadd.s32 %v99, 8
    %v101 = vadd.s32 %v99, 16
    %v102 = vadd.s32 %v99, 24
    %vm103 = vcmp.lt.s32.totalorder %v99, 0
    %v104 = vsub.s32 0, %v99
    %v105 = vsel %vm103, %v104, %v99
    %v106 = vshrl.u32 %v105, 4
    %v107 = vand.u32 %v105, 15
    %v108 = vsub.s32 0, %v107
    %v109 = vsel %vm103, %v108, %v107
    %vm110 = vcmp.lt.s32.totalorder %v100, 0
    %v111 = vsub.s32 0, %v100
    %v112 = vsel %vm110, %v111, %v100
    %v113 = vshrl.u32 %v112, 4
    %v114 = vand.u32 %v112, 15
    %v115 = vsub.s32 0, %v114
    %v116 = vsel %vm110, %v115, %v114
    %vm117 = vcmp.lt.s32.totalorder %v101, 0
    %v118 = vsub.s32 0, %v101
    %v119 = vsel %vm117, %v118, %v101
    %v120 = vshrl.u32 %v119, 4
    %v121 = vand.u32 %v119, 15
    %v122 = vsub.s32 0, %v121
    %v123 = vsel %vm117, %v122, %v121
    %vm124 = vcmp.lt.s32.totalorder %v102, 0
    %v125 = vsub.s32 0, %v102
    %v126 = vsel %vm124, %v125, %v102
    %v127 = vshrl.u32 %v126, 4
    %v128 = vand.u32 %v126, 15
    %v129 = vsub.s32 0, %v128
    %v130 = vsel %vm124, %v129, %v128
    %vm131 = vcmp.ne.s32.totalorder %v109, 0
    %vm132 = vcmp.ne.s32.totalorder %v116, 0
    %vm133 = vcmp.ne.s32.totalorder %v123, 0
    %vm134 = vcmp.ne.s32.totalorder %v130, 0
    %vm135 = vcmp.lt.s32.totalorder %v109, 0
    %vm136 = vcmp.lt.s32.totalorder %v116, 0
    %vm137 = vcmp.lt.s32.totalorder %v123, 0
    %vm138 = vcmp.lt.s32.totalorder %v130, 0
    %vm139 = vmand %vm135, %vm131
    %vm140 = vmand %vm136, %vm132
    %vm141 = vmand %vm137, %vm133
    %vm142 = vmand %vm138, %vm134
    %v143 = vadd.s32 %v109, 16
    %v144 = vadd.s32 %v116, 16
    %v145 = vadd.s32 %v123, 16
    %v146 = vadd.s32 %v130, 16
    %v147 = vsel %vm139, %v143, %v109
    %v148 = vsel %vm140, %v144, %v116
    %v149 = vsel %vm141, %v145, %v123
    %v150 = vsel %vm142, %v146, %v130
    %vm151 = vcmp.eq.s32.totalorder %v147, 0
    %vm152 = vcmp.eq.s32.totalorder %v148, 0
    %vm153 = vcmp.eq.s32.totalorder %v149, 0
    %vm154 = vcmp.eq.s32.totalorder %v150, 0
    %v155 = vrot.slane %v94, 7
    %v156 = vrot.slane %v95, 7
    %v157 = vrot.slane %v96, 7
    %v158 = vrot.slane %v97, 7
    %vm159 = vcmp.lt.s32.totalorder %v99, 1
    %v160 = vsel %vm159, %v157, %v158
    %v161 = vsel %vm159, %v156, %v157
    %v162 = vsel %vm159, %v155, %v156
    %v163 = vsel %vm159, %v158, %v155
    %v164 = vsel %vm151, 0.0, %v163
    %v165 = vsel %vm152, 0.0, %v162
    %v166 = vsel %vm153, 0.0, %v161
    %v167 = vsel %vm154, 0.0, %v160
    %vm168 = vcmp.eq.s32.totalorder %v147, 15
    %vm169 = vcmp.eq.s32.totalorder %v148, 15
    %vm170 = vcmp.eq.s32.totalorder %v149, 15
    %vm171 = vcmp.eq.s32.totalorder %v150, 15
    %v172 = vrot.slane %v94, 1
    %v173 = vrot.slane %v95, 1
    %v174 = vrot.slane %v96, 1
    %v175 = vrot.slane %v97, 1
    %vm176 = vcmp.lt.s32.totalorder %v99, 7
    %v177 = vsel %vm176, %v174, %v175
    %v178 = vsel %vm176, %v173, %v174
    %v179 = vsel %vm176, %v172, %v173
    %v180 = vsel %vm176, %v175, %v172
    %v181 = vsel %vm168, 0.0, %v179
    %v182 = vsel %vm169, 0.0, %v178
    %v183 = vsel %vm170, 0.0, %v177
    %v184 = vsel %vm171, 0.0, %v180
    %v185 = vpack.c.bf16 %v165, %v164
    %v186 = vpack.c.bf16 %v167, %v166
    %v187 = vld [vmem:[%s5] sm:$0xf]
    %v188 = vld [vmem:[%s5 + $0x4] sm:$0xf]
    %v189 = vld [vmem:[%s5 + $0x8] sm:$0xf]
    %v190 = vld [vmem:[%s5 + $0xc] sm:$0xf]
    %v191 = vld [vmem:[%s5 + $0x10] sm:$0xf]
    %v192 = vld [vmem:[%s5 + $0x14] sm:$0xf]
    %v193 = vld [vmem:[%s5 + $0x18] sm:$0xf]
    %v194 = vld [vmem:[%s5 + $0x1c] sm:$0xf]
    %v195 = vld [vmem:[%s5 + $0x20] sm:$0xf]
    %v196 = vld [vmem:[%s5 + $0x24] sm:$0xf]
    %v197 = vld [vmem:[%s5 + $0x28] sm:$0xf]
    %v198 = vld [vmem:[%s5 + $0x2c] sm:$0xf]
    %v199 = vld [vmem:[%s5 + $0x30] sm:$0xf]
    %v200 = vld [vmem:[%s5 + $0x34] sm:$0xf]
    %v201 = vld [vmem:[%s5 + $0x38] sm:$0xf]
    %v202 = vld [vmem:[%s5 + $0x3c] sm:$0xf]
    %v203 = vpack.c.bf16 %v95, %v94
    %v204 = vpack.c.bf16 %v97, %v96
    %v205 = vld [vmem:[%s6] sm:$0xf]
    %v206 = vld [vmem:[%s6 + $0x4] sm:$0xf]
    %v207 = vld [vmem:[%s6 + $0x8] sm:$0xf]
    %v208 = vld [vmem:[%s6 + $0xc] sm:$0xf]
    %v209 = vld [vmem:[%s6 + $0x10] sm:$0xf]
    %v210 = vld [vmem:[%s6 + $0x14] sm:$0xf]
    %v211 = vld [vmem:[%s6 + $0x18] sm:$0xf]
    %v212 = vld [vmem:[%s6 + $0x1c] sm:$0xf]
    %v213 = vld [vmem:[%s6 + $0x20] sm:$0xf]
    %v214 = vld [vmem:[%s6 + $0x24] sm:$0xf]
    %v215 = vld [vmem:[%s6 + $0x28] sm:$0xf]
    %v216 = vld [vmem:[%s6 + $0x2c] sm:$0xf]
    %v217 = vld [vmem:[%s6 + $0x30] sm:$0xf]
    %v218 = vld [vmem:[%s6 + $0x34] sm:$0xf]
    %v219 = vld [vmem:[%s6 + $0x38] sm:$0xf]
    %v220 = vld [vmem:[%s6 + $0x3c] sm:$0xf]
    %v237 = vunpack.c.l.b16 %v205
    %v238 = vunpack.c.l.b16 %v206
    %v239 = vunpack.c.l.b16 %v207
    %v240 = vunpack.c.l.b16 %v208
    %v241 = vunpack.c.l.b16 %v209
    %v242 = vunpack.c.l.b16 %v210
    %v243 = vunpack.c.l.b16 %v211
    %v244 = vunpack.c.l.b16 %v212
    %v245 = vunpack.c.l.b16 %v213
    %v246 = vunpack.c.l.b16 %v214
    %v247 = vunpack.c.l.b16 %v215
    %v248 = vunpack.c.l.b16 %v216
    %v249 = vunpack.c.l.b16 %v217
    %v250 = vunpack.c.l.b16 %v218
    %v251 = vunpack.c.l.b16 %v219
    %v252 = vunpack.c.l.b16 %v220
    %v253 = vpack.c.b16 %v238, %v237
    %v254 = vpack.c.b16 %v240, %v239
    %v255 = vpack.c.b16 %v242, %v241
    %v256 = vpack.c.b16 %v244, %v243
    %v257 = vpack.c.b16 %v246, %v245
    %v258 = vpack.c.b16 %v248, %v247
    %v259 = vpack.c.b16 %v250, %v249
    %v260 = vpack.c.b16 %v252, %v251
    %269 = vmatpush.bf16.msra.mxu0 %v260
    %270 = vmatpush.bf16.msra.mxu0 %v259
    %271 = vmatpush.bf16.msra.mxu0 %v258
    %272 = vmatpush.bf16.msra.mxu0 %v257
    %273 = vmatpush.bf16.msra.mxu0 %v256
    %274 = vmatpush.bf16.msra.mxu0 %v255
    %275 = vmatpush.bf16.msra.mxu0 %v254
    %276 = vmatpush.bf16.msra.mxu0 %v253
    %277 = vmatmul.bf16.gmra.mxu0 %v203
    %v278 = vpop.f32.mrf.mxu0
    %v279 = vadd.f32 0.0, %v278
    %v280 = vpop.f32.mrf.mxu0
    %v281 = vadd.f32 0.0, %v280
    %282 = vmatmul.bf16.gmra.mxu0 %v204
    %v283 = vpop.f32.mrf.mxu0
    %v284 = vadd.f32 0.0, %v283
    %v285 = vpop.f32.mrf.mxu0
    %v286 = vadd.f32 0.0, %v285
    %287 = vdwg.mxu0
    %v304 = vunpack.c.l.b16 %v187
    %v305 = vunpack.c.l.b16 %v188
    %v306 = vunpack.c.l.b16 %v189
    %v307 = vunpack.c.l.b16 %v190
    %v308 = vunpack.c.l.b16 %v191
    %v309 = vunpack.c.l.b16 %v192
    %v310 = vunpack.c.l.b16 %v193
    %v311 = vunpack.c.l.b16 %v194
    %v312 = vunpack.c.l.b16 %v195
    %v313 = vunpack.c.l.b16 %v196
    %v314 = vunpack.c.l.b16 %v197
    %v315 = vunpack.c.l.b16 %v198
    %v316 = vunpack.c.l.b16 %v199
    %v317 = vunpack.c.l.b16 %v200
    %v318 = vunpack.c.l.b16 %v201
    %v319 = vunpack.c.l.b16 %v202
    %v320 = vpack.c.b16 %v305, %v304
    %v321 = vpack.c.b16 %v307, %v306
    %v322 = vpack.c.b16 %v309, %v308
    %v323 = vpack.c.b16 %v311, %v310
    %v324 = vpack.c.b16 %v313, %v312
    %v325 = vpack.c.b16 %v315, %v314
    %v326 = vpack.c.b16 %v317, %v316
    %v327 = vpack.c.b16 %v319, %v318
    %336 = vmatpush.bf16.msra.mxu0 %v327
    %337 = vmatpush.bf16.msra.mxu0 %v326
    %338 = vmatpush.bf16.msra.mxu0 %v325
    %339 = vmatpush.bf16.msra.mxu0 %v324
    %340 = vmatpush.bf16.msra.mxu0 %v323
    %341 = vmatpush.bf16.msra.mxu0 %v322
    %342 = vmatpush.bf16.msra.mxu0 %v321
    %343 = vmatpush.bf16.msra.mxu0 %v320
    %344 = vmatmul.bf16.gmra.mxu0 %v185
    %v345 = vpop.f32.mrf.mxu0
    %v346 = vadd.f32 %v279, %v345
    %v347 = vpop.f32.mrf.mxu0
    %v348 = vadd.f32 %v281, %v347
    %349 = vmatmul.bf16.gmra.mxu0 %v186
    %v350 = vpop.f32.mrf.mxu0
    %v351 = vadd.f32 %v284, %v350
    %v352 = vpop.f32.mrf.mxu0
    %v353 = vadd.f32 %v286, %v352
    %354 = vdwg.mxu0
    %v355 = vpack.c.bf16 %v182, %v181
    %v356 = vpack.c.bf16 %v184, %v183
    %v357 = vld [vmem:[%s7] sm:$0xf]
    %v358 = vld [vmem:[%s7 + $0x4] sm:$0xf]
    %v359 = vld [vmem:[%s7 + $0x8] sm:$0xf]
    %v360 = vld [vmem:[%s7 + $0xc] sm:$0xf]
    %v361 = vld [vmem:[%s7 + $0x10] sm:$0xf]
    %v362 = vld [vmem:[%s7 + $0x14] sm:$0xf]
    %v363 = vld [vmem:[%s7 + $0x18] sm:$0xf]
    %v364 = vld [vmem:[%s7 + $0x1c] sm:$0xf]
    %v365 = vld [vmem:[%s7 + $0x20] sm:$0xf]
    %v366 = vld [vmem:[%s7 + $0x24] sm:$0xf]
    %v367 = vld [vmem:[%s7 + $0x28] sm:$0xf]
    %v368 = vld [vmem:[%s7 + $0x2c] sm:$0xf]
    %v369 = vld [vmem:[%s7 + $0x30] sm:$0xf]
    %v370 = vld [vmem:[%s7 + $0x34] sm:$0xf]
    %v371 = vld [vmem:[%s7 + $0x38] sm:$0xf]
    %v372 = vld [vmem:[%s7 + $0x3c] sm:$0xf]
    %v389 = vunpack.c.l.b16 %v357
    %v390 = vunpack.c.l.b16 %v358
    %v391 = vunpack.c.l.b16 %v359
    %v392 = vunpack.c.l.b16 %v360
    %v393 = vunpack.c.l.b16 %v361
    %v394 = vunpack.c.l.b16 %v362
    %v395 = vunpack.c.l.b16 %v363
    %v396 = vunpack.c.l.b16 %v364
    %v397 = vunpack.c.l.b16 %v365
    %v398 = vunpack.c.l.b16 %v366
    %v399 = vunpack.c.l.b16 %v367
    %v400 = vunpack.c.l.b16 %v368
    %v401 = vunpack.c.l.b16 %v369
    %v402 = vunpack.c.l.b16 %v370
    %v403 = vunpack.c.l.b16 %v371
    %v404 = vunpack.c.l.b16 %v372
    %v405 = vpack.c.b16 %v390, %v389
    %v406 = vpack.c.b16 %v392, %v391
    %v407 = vpack.c.b16 %v394, %v393
    %v408 = vpack.c.b16 %v396, %v395
    %v409 = vpack.c.b16 %v398, %v397
    %v410 = vpack.c.b16 %v400, %v399
    %v411 = vpack.c.b16 %v402, %v401
    %v412 = vpack.c.b16 %v404, %v403
    %421 = vmatpush.bf16.msra.mxu0 %v412
    %422 = vmatpush.bf16.msra.mxu0 %v411
    %423 = vmatpush.bf16.msra.mxu0 %v410
    %424 = vmatpush.bf16.msra.mxu0 %v409
    %425 = vmatpush.bf16.msra.mxu0 %v408
    %426 = vmatpush.bf16.msra.mxu0 %v407
    %427 = vmatpush.bf16.msra.mxu0 %v406
    %428 = vmatpush.bf16.msra.mxu0 %v405
    %429 = vmatmul.bf16.gmra.mxu0 %v355
    %v430 = vpop.f32.mrf.mxu0
    %v431 = vadd.f32 0.0, %v430
    %v432 = vpop.f32.mrf.mxu0
    %v433 = vadd.f32 0.0, %v432
    %434 = vmatmul.bf16.gmra.mxu0 %v356
    %v435 = vpop.f32.mrf.mxu0
    %v436 = vadd.f32 0.0, %v435
    %v437 = vpop.f32.mrf.mxu0
    %v438 = vadd.f32 0.0, %v437
    %439 = vdwg.mxu0
    %v440 = vadd.f32 %v346, %v431
    %v441 = vadd.f32 %v348, %v433
    %v442 = vadd.f32 %v351, %v436
    %v443 = vadd.f32 %v353, %v438
    %v444 = vld [vmem:[%s4] sm:$0xff]
    %v445 = vld [vmem:[%s4 + $0x8] sm:$0xff]
    %v446 = vld [vmem:[%s4 + $0x10] sm:$0xff]
    %v447 = vld [vmem:[%s4 + $0x18] sm:$0xff]
    %v448 = vadd.f32 %v440, %v444
    %v449 = vadd.f32 %v441, %v445
    %v450 = vadd.f32 %v442, %v446
    %v451 = vadd.f32 %v443, %v447
    %v452 = vsub.f32 %v30, %v448
    %v453 = vsub.f32 %v31, %v449
    %v454 = vsub.f32 %v32, %v450
    %v455 = vsub.f32 %v33, %v451
    %v456 = vmul.f32 %v452, %v452
    %v457 = vmul.f32 %v453, %v453
    %v458 = vmul.f32 %v454, %v454
    %v459 = vmul.f32 %v455, %v455
    %v460 = vadd.f32 %v456, %v457
    %v461 = vadd.f32 %v460, %v458
    %v462 = vadd.f32 %v461, %v459
    %463 = vadd.xlane.f32.xlu0 %v462
    %v464 = vpop.xlane.xlu0 %463
    %v465 = vrot.slane %v464, 4
    %v466 = vadd.f32 %v464, %v465
    %v467 = vrot.slane %v466, 2
    %v468 = vadd.f32 %v466, %v467
    %v469 = vrot.slane %v468, 1
    %v470 = vadd.f32 %v468, %v469
    %s471 = vtos %v470
    %s472 = scalar_lea.smem [#allocation2], 0
    %473 = sst [smem:[%s472]] %s471
    // Predicated region
    $region34: #{loss_pallas.1} parent=1 // pred_check
      _
    $region35: #{loss_pallas.1} parent=1 // pred_check_branch
      %475 = sbr.rel (0) target = $region37
    $region36: #{loss_pallas.1} parent=1 // pred_region
      %477 = vsyncadd [#allocation3], 0
      %s479 = sshll.u32 %s8, 4
      %s480 = int_to_ptr.hbm [resolvable:$true] %s479
      %482 = dma.smem_to_hbm [#allocation2], 16, %s480, [#allocation3]
    $region37: #{loss_pallas.1} parent=1 // pred_fallthru
      _
    // Predicated region
    $region38: #{loss_pallas.1} parent=1 // pred_check
      _
    $region39: #{loss_pallas.1} parent=1 // pred_check_branch
      %484 = sbr.rel (0) target = $region41
    $region40: #{loss_pallas.1} parent=1 // pred_region
      %486 = dma.done [#allocation3], 16
    $region41: #{loss_pallas.1} parent=1 // pred_fallthru
      _
    %487 = sfence
    %488 = vsyncpa [#allocation3], 1

</llo_original>
